<compile_context>
chip_gen: v5e
topology: v5e:2x2
jax: 0.10.0
libtpu: 0.0.40
codegen_flags: <defaults>
</compile_context>

<pallas_src>
import functools

import jax
import jax.numpy as jnp
from jax import lax
from jax.experimental import pallas as pl
from jax.experimental.pallas import tpu as pltpu

_BN_EPS = 1e-5
_LANE = 128
_SUBLANE = 8


def _round_up(x, m):
    return (x + m - 1) // m * m


# --------------------- pass 1: BatchNorm1d batch statistics ---------------------
def _bn_stats_kernel(x_ref, mean_ref, rstd_ref, sum_ref, sq_ref, *, n_rows):
    i = pl.program_id(0)

    @pl.when(i == 0)
    def _():
        sum_ref[...] = jnp.zeros_like(sum_ref)
        sq_ref[...] = jnp.zeros_like(sq_ref)

    x = x_ref[...].astype(jnp.float32)
    sum_ref[...] += jnp.sum(x, axis=0, keepdims=True)
    sq_ref[...] += jnp.sum(x * x, axis=0, keepdims=True)

    @pl.when(i == pl.num_programs(0) - 1)
    def _():
        inv_n = jnp.float32(1.0 / n_rows)
        mean = sum_ref[...] * inv_n
        var = sq_ref[...] * inv_n - mean * mean  # biased variance (training-mode BN)
        mean_ref[...] = mean
        rstd_ref[...] = lax.rsqrt(var + jnp.float32(_BN_EPS))


# --------------------- pass 2: fused BN-apply + MLP ---------------------
def _mlp_kernel(x_ref, mean_ref, rstd_ref, gamma_ref, beta_ref,
                w1_ref, b1_ref, wh_ref, bh_ref, w2_ref, b2_ref,
                o_ref, *, num_hidden_layers, batchnorm):
    x = x_ref[...].astype(jnp.float32)

    if batchnorm:
        # Elementwise BN math in f32 (v5e-friendly), stats computed over the FULL batch.
        x = (x - mean_ref[...]) * rstd_ref[...] * gamma_ref[...] + beta_ref[...]

    # fc1 + ReLU  (bf16 MXU inputs, f32 accumulation)
    h = jnp.dot(x.astype(jnp.bfloat16), w1_ref[...],
                preferred_element_type=jnp.float32) + b1_ref[...]
    h = jnp.maximum(h, 0.0)

    # hidden Linear + ReLU stack
    if num_hidden_layers <= 4:
        for i in range(num_hidden_layers):
            h = jnp.dot(h.astype(jnp.bfloat16), wh_ref[i],
                        preferred_element_type=jnp.float32) + bh_ref[i]
            h = jnp.maximum(h, 0.0)
    else:
        def body(i, h):
            h = jnp.dot(h.astype(jnp.bfloat16), wh_ref[i],
                        preferred_element_type=jnp.float32) + bh_ref[i]
            return jnp.maximum(h, 0.0)
        h = lax.fori_loop(0, num_hidden_layers, body, h, unroll=True)

    # fc2 (no activation) -> lane-dense (128-padded) output store
    o_ref[...] = (jnp.dot(h.astype(jnp.bfloat16), w2_ref[...],
                          preferred_element_type=jnp.float32)
                  + b2_ref[...]).astype(o_ref.dtype)


def mlp_forward(x, params, *, batchnorm=True, batch_tile=256):
    """x: [N, input_dim] float32.  params: f32 dict from init_params (PyTorch layout,
    weights stored as (in, out)).  Returns [N, output_dim] float32."""
    N, D = x.shape
    H = params["w1"].shape[1]
    O = params["w2"].shape[1]
    L = int(params["wh"].shape[0])

    f32, bf16 = jnp.float32, jnp.bfloat16

    # ---- padding to hardware-friendly shapes ----
    D_pad = _round_up(D, _LANE)
    H_pad = _round_up(H, _LANE)
    O_pad = _round_up(O, _LANE)
    tile_n = min(batch_tile, _round_up(N, _SUBLANE))
    N_pad = _round_up(N, tile_n)
    n_tiles = N_pad // tile_n

    def pad2(a, r, c, dtype):
        a = a.astype(f32)
        return jnp.pad(a, ((0, r - a.shape[0]), (0, c - a.shape[1]))).astype(dtype)

    x_p = jnp.pad(x.astype(f32), ((0, N_pad - N), (0, D_pad - D)))
    gamma = pad2(params["gamma"], 1, D_pad, f32)
    beta = pad2(params["beta"], 1, D_pad, f32)
    w1 = pad2(params["w1"], D_pad, H_pad, bf16)
    b1 = pad2(params["b1"], 1, H_pad, f32)
    w2 = pad2(params["w2"], H_pad, O_pad, bf16)
    b2 = pad2(params["b2"], 1, O_pad, f32)
    if L > 0:
        wh = jnp.pad(params["wh"].astype(f32),
                     ((0, 0), (0, H_pad - H), (0, H_pad - H))).astype(bf16)
        bh = jnp.pad(params["bh"].astype(f32),
                     ((0, 0), (0, 0), (0, H_pad - H)))
    else:  # dummy stack so the kernel signature stays fixed; loop is skipped
        wh = jnp.zeros((1, H_pad, H_pad), bf16)
        bh = jnp.zeros((1, 1, H_pad), f32)
    Ls = wh.shape[0]

    # ---- pass 1: BN statistics over the full (real) batch ----
    if batchnorm:
        mean, rstd = pl.pallas_call(
            functools.partial(_bn_stats_kernel, n_rows=N),
            out_shape=(jax.ShapeDtypeStruct((1, D_pad), f32),
                       jax.ShapeDtypeStruct((1, D_pad), f32)),
            grid_spec=pltpu.PrefetchScalarGridSpec(
                num_scalar_prefetch=0,
                grid=(n_tiles,),
                in_specs=[pl.BlockSpec((tile_n, D_pad), lambda i: (i, 0))],
                out_specs=[pl.BlockSpec((1, D_pad), lambda i: (0, 0)),
                           pl.BlockSpec((1, D_pad), lambda i: (0, 0))],
                scratch_shapes=[pltpu.VMEM((1, D_pad), f32),
                                pltpu.VMEM((1, D_pad), f32)]),
            compiler_params=pltpu.CompilerParams(
                dimension_semantics=("arbitrary",)),
        )(x_p)
    else:
        mean = jnp.zeros((1, D_pad), f32)
        rstd = jnp.ones((1, D_pad), f32)

    # ---- pass 2: fused MLP, batch-tiled grid, weights resident ----
    kernel = functools.partial(_mlp_kernel,
                               num_hidden_layers=L,
                               batchnorm=batchnorm)

    flops = 2 * N_pad * H_pad * (D_pad + L * H_pad + O_pad)
    bytes_accessed = (x_p.size * 4 + N_pad * O_pad * 4
                      + (w1.size + wh.size + w2.size) * 2
                      + (b1.size + bh.size + b2.size + 4 * D_pad) * 4)
    cost = pl.CostEstimate(flops=int(flops), transcendentals=0,
                           bytes_accessed=int(bytes_accessed))

    out = pl.pallas_call(
        kernel,
        out_shape=jax.ShapeDtypeStruct((N_pad, O_pad), f32),
        grid_spec=pltpu.PrefetchScalarGridSpec(
            num_scalar_prefetch=0,
            grid=(n_tiles,),
            in_specs=[
                pl.BlockSpec((tile_n, D_pad), lambda i: (i, 0)),     # x tile (pipelined)
                pl.BlockSpec((1, D_pad), lambda i: (0, 0)),          # mean
                pl.BlockSpec((1, D_pad), lambda i: (0, 0)),          # rstd
                pl.BlockSpec((1, D_pad), lambda i: (0, 0)),          # gamma
                pl.BlockSpec((1, D_pad), lambda i: (0, 0)),          # beta
                pl.BlockSpec((D_pad, H_pad), lambda i: (0, 0)),      # w1 (resident)
                pl.BlockSpec((1, H_pad), lambda i: (0, 0)),          # b1
                pl.BlockSpec((Ls, H_pad, H_pad), lambda i: (0, 0, 0)),  # wh stack
                pl.BlockSpec((Ls, 1, H_pad), lambda i: (0, 0, 0)),      # bh stack
                pl.BlockSpec((H_pad, O_pad), lambda i: (0, 0)),      # w2
                pl.BlockSpec((1, O_pad), lambda i: (0, 0)),          # b2
            ],
            out_specs=pl.BlockSpec((tile_n, O_pad), lambda i: (i, 0)),
        ),
        compiler_params=pltpu.CompilerParams(
            dimension_semantics=("parallel",),
            vmem_limit_bytes=48 * 1024 * 1024),
        cost_estimate=cost,
    )(x_p, mean, rstd, gamma, beta, w1, b1, wh, bh, w2, b2)

    return out[:N, :O]


def init_params(key, input_dim, hidden_dim, output_dim, hidden_layers=1):
    """Deterministic PyTorch-style init: U(-1/sqrt(fan_in), 1/sqrt(fan_in)); f32, unpadded."""
    ks = jax.random.split(key, 8)

    def lin(kw, kb, fan_in, fan_out):
        bound = 1.0 / jnp.sqrt(fan_in)
        w = jax.random.uniform(kw, (fan_in, fan_out), jnp.float32, -bound, bound)
        b = jax.random.uniform(kb, (1, fan_out), jnp.float32, -bound, bound)
        return w, b

    w1, b1 = lin(ks[0], ks[1], input_dim, hidden_dim)
    wh_list, bh_list = [], []
    if hidden_layers > 0:
        khs = jax.random.split(ks[2], 2 * hidden_layers)
        for i in range(hidden_layers):
            w, b = lin(khs[2 * i], khs[2 * i + 1], hidden_dim, hidden_dim)
            wh_list.append(w)
            bh_list.append(b)
        wh = jnp.stack(wh_list, axis=0)          # (L, H, H)
        bh = jnp.stack(bh_list, axis=0)          # (L, 1, H)
    else:
        wh = jnp.zeros((0, hidden_dim, hidden_dim), jnp.float32)
        bh = jnp.zeros((0, 1, hidden_dim), jnp.float32)
    w2, b2 = lin(ks[3], ks[4], hidden_dim, output_dim)

    gamma = jnp.ones((1, input_dim), jnp.float32)   # BatchNorm1d weight
    beta = jnp.zeros((1, input_dim), jnp.float32)   # BatchNorm1d bias
    return dict(gamma=gamma, beta=beta, w1=w1, b1=b1, wh=wh, bh=bh, w2=w2, b2=b2)


def mlp_reference(x, params, *, batchnorm=True):
    """Pure-JAX f32 reference mirroring the PyTorch forward (training-mode BN)."""
    if batchnorm:
        mean = jnp.mean(x, axis=0, keepdims=True)
        var = jnp.mean((x - mean) ** 2, axis=0, keepdims=True)
        x = (x - mean) / jnp.sqrt(var + _BN_EPS) * params["gamma"] + params["beta"]
    h = jnp.maximum(x @ params["w1"] + params["b1"], 0.0)
    for i in range(params["wh"].shape[0]):
        h = jnp.maximum(h @ params["wh"][i] + params["bh"][i], 0.0)
    return h @ params["w2"] + params["b2"]


if __name__ == "__main__":
    key = jax.random.PRNGKey(0)
    k_x, k_p = jax.random.split(key)

    N, input_dim, hidden_dim, output_dim, hidden_layers = 8, 32, 32, 16, 1

    x = jax.random.normal(k_x, (N, input_dim), jnp.float32)
    params = init_params(k_p, input_dim, hidden_dim, output_dim, hidden_layers)

    out = mlp_forward(x, params, batchnorm=True)
    out = jax.block_until_ready(out)

    ref = mlp_reference(x, params, batchnorm=True)
    assert out.shape == (N, output_dim)
    # bf16 MXU inputs with f32 accumulation -> slightly looser tolerance than pure f32
    assert jnp.allclose(out, ref, atol=5e-2, rtol=5e-2), "mismatch vs reference"

    print("KERNEL_OK")
</pallas_src>

<mosaic_0001>
module attributes {stable_mosaic.version = 11 : i64} {
  func.func @_bn_stats_kernel(%arg0: i32, %arg1: memref<8x128xf32, #tpu.memory_space<vmem>>, %arg2: memref<1x128xf32, #tpu.memory_space<vmem>>, %arg3: memref<1x128xf32, #tpu.memory_space<vmem>>, %arg4: memref<1x128xf32, #tpu.memory_space<vmem>>, %arg5: memref<1x128xf32, #tpu.memory_space<vmem>>) attributes {dimension_semantics = [#tpu.dimension_semantics<arbitrary>], iteration_bounds = array<i64: 1>, scalar_prefetch = 0 : i64, scratch_operands = 2 : i64, tpu.core_type = #tpu.core_type<tc>, window_params = [{transform_indices = @transform_0, window_bounds = array<i64: 8, 128>}, {pipeline_mode = #tpu.pipeline_mode<synchronous>, transform_indices = @transform_1, window_bounds = array<i64: 1, 128>}, {pipeline_mode = #tpu.pipeline_mode<synchronous>, transform_indices = @transform_2, window_bounds = array<i64: 1, 128>}]} {
    %c0_i32 = arith.constant 0 : i32
    %0 = arith.cmpi eq, %arg0, %c0_i32 : i32
    %1 = arith.extui %0 : i1 to i32
    %c0_i32_0 = arith.constant 0 : i32
    %2 = arith.cmpi ne, %1, %c0_i32_0 : i32
    scf.if %2 {
      %cst_13 = arith.constant 0.000000e+00 : f32
      %18 = vector.broadcast %cst_13 : f32 to vector<1x128xf32>
      %c0_14 = arith.constant 0 : index
      %c0_15 = arith.constant 0 : index
      %19 = vector.load %arg4[%c0_14, %c0_15] : memref<1x128xf32, #tpu.memory_space<vmem>>, vector<1x128xf32>
      tpu.vector_store %arg4[%c0_14, %c0_15], %18 {strides = array<i32>} : memref<1x128xf32, #tpu.memory_space<vmem>>, vector<1x128xf32>,
      %cst_16 = arith.constant 0.000000e+00 : f32
      %20 = vector.broadcast %cst_16 : f32 to vector<1x128xf32>
      %c0_17 = arith.constant 0 : index
      %c0_18 = arith.constant 0 : index
      %21 = vector.load %arg5[%c0_17, %c0_18] : memref<1x128xf32, #tpu.memory_space<vmem>>, vector<1x128xf32>
      tpu.vector_store %arg5[%c0_17, %c0_18], %20 {strides = array<i32>} : memref<1x128xf32, #tpu.memory_space<vmem>>, vector<1x128xf32>,
    } else {
    }
    %c0 = arith.constant 0 : index
    %c0_1 = arith.constant 0 : index
    %3 = vector.load %arg1[%c0, %c0_1] : memref<8x128xf32, #tpu.memory_space<vmem>>, vector<8x128xf32>
    %c0_2 = arith.constant 0 : index
    %c0_3 = arith.constant 0 : index
    %4 = vector.load %arg4[%c0_2, %c0_3] : memref<1x128xf32, #tpu.memory_space<vmem>>, vector<1x128xf32>
    %cst = arith.constant dense<0.000000e+00> : vector<128xf32>
    %5 = vector.multi_reduction <add>, %3, %cst [0] : vector<8x128xf32> to vector<128xf32>
    %6 = vector.shape_cast %5 : vector<128xf32> to vector<1x128xf32>
    %7 = arith.addf %4, %6 : vector<1x128xf32>
    %c0_4 = arith.constant 0 : index
    %c0_5 = arith.constant 0 : index
    %8 = vector.load %arg4[%c0_4, %c0_5] : memref<1x128xf32, #tpu.memory_space<vmem>>, vector<1x128xf32>
    tpu.vector_store %arg4[%c0_4, %c0_5], %7 {strides = array<i32>} : memref<1x128xf32, #tpu.memory_space<vmem>>, vector<1x128xf32>,
    %c0_6 = arith.constant 0 : index
    %c0_7 = arith.constant 0 : index
    %9 = vector.load %arg5[%c0_6, %c0_7] : memref<1x128xf32, #tpu.memory_space<vmem>>, vector<1x128xf32>
    %10 = arith.mulf %3, %3 : vector<8x128xf32>
    %cst_8 = arith.constant dense<0.000000e+00> : vector<128xf32>
    %11 = vector.multi_reduction <add>, %10, %cst_8 [0] : vector<8x128xf32> to vector<128xf32>
    %12 = vector.shape_cast %11 : vector<128xf32> to vector<1x128xf32>
    %13 = arith.addf %9, %12 : vector<1x128xf32>
    %c0_9 = arith.constant 0 : index
    %c0_10 = arith.constant 0 : index
    %14 = vector.load %arg5[%c0_9, %c0_10] : memref<1x128xf32, #tpu.memory_space<vmem>>, vector<1x128xf32>
    tpu.vector_store %arg5[%c0_9, %c0_10], %13 {strides = array<i32>} : memref<1x128xf32, #tpu.memory_space<vmem>>, vector<1x128xf32>,
    %c0_i32_11 = arith.constant 0 : i32
    %15 = arith.cmpi eq, %arg0, %c0_i32_11 : i32
    %16 = arith.extui %15 : i1 to i32
    %c0_i32_12 = arith.constant 0 : i32
    %17 = arith.cmpi ne, %16, %c0_i32_12 : i32
    scf.if %17 {
      %c0_13 = arith.constant 0 : index
      %c0_14 = arith.constant 0 : index
      %18 = vector.load %arg4[%c0_13, %c0_14] : memref<1x128xf32, #tpu.memory_space<vmem>>, vector<1x128xf32>
      %cst_15 = arith.constant 1.250000e-01 : f32
      %19 = vector.broadcast %cst_15 : f32 to vector<1x128xf32>
      %20 = arith.mulf %18, %19 : vector<1x128xf32>
      %c0_16 = arith.constant 0 : index
      %c0_17 = arith.constant 0 : index
      %21 = vector.load %arg5[%c0_16, %c0_17] : memref<1x128xf32, #tpu.memory_space<vmem>>, vector<1x128xf32>
      %cst_18 = arith.constant 1.250000e-01 : f32
      %22 = vector.broadcast %cst_18 : f32 to vector<1x128xf32>
      %23 = arith.mulf %21, %22 : vector<1x128xf32>
      %24 = arith.mulf %20, %20 : vector<1x128xf32>
      %25 = arith.subf %23, %24 : vector<1x128xf32>
      %c0_19 = arith.constant 0 : index
      %c0_20 = arith.constant 0 : index
      %26 = vector.load %arg2[%c0_19, %c0_20] : memref<1x128xf32, #tpu.memory_space<vmem>>, vector<1x128xf32>
      tpu.vector_store %arg2[%c0_19, %c0_20], %20 {strides = array<i32>} : memref<1x128xf32, #tpu.memory_space<vmem>>, vector<1x128xf32>,
      %cst_21 = arith.constant 9.99999974E-6 : f32
      %27 = vector.broadcast %cst_21 : f32 to vector<1x128xf32>
      %28 = arith.addf %25, %27 : vector<1x128xf32>
      %29 = math.rsqrt %28 : vector<1x128xf32>
      %c0_22 = arith.constant 0 : index
      %c0_23 = arith.constant 0 : index
      %30 = vector.load %arg3[%c0_22, %c0_23] : memref<1x128xf32, #tpu.memory_space<vmem>>, vector<1x128xf32>
      tpu.vector_store %arg3[%c0_22, %c0_23], %29 {strides = array<i32>} : memref<1x128xf32, #tpu.memory_space<vmem>>, vector<1x128xf32>,
    } else {
    }
    return
  }
  func.func @transform_0(%arg0: i32) -> (i32, i32) {
    %c0_i32 = arith.constant 0 : i32
    %c0_i32_0 = arith.constant 0 : i32
    return %arg0, %c0_i32 : i32, i32
  }
  func.func @transform_1(%arg0: i32) -> (i32, i32) {
    %c0_i32 = arith.constant 0 : i32
    %c0_i32_0 = arith.constant 0 : i32
    %c0_i32_1 = arith.constant 0 : i32
    return %c0_i32, %c0_i32_0 : i32, i32
  }
  func.func @transform_2(%arg0: i32) -> (i32, i32) {
    %c0_i32 = arith.constant 0 : i32
    %c0_i32_0 = arith.constant 0 : i32
    %c0_i32_1 = arith.constant 0 : i32
    return %c0_i32, %c0_i32_0 : i32, i32
  }
}

</mosaic_0001>

<llo_original>
// kernel: tpu_custom_call.1
$region0: #{tpu_custom_call.1}
  #allocation0 [shape = 'u32[]', space=smem, size = 0x4, offset = 0x4, fixed_abs, tag = 'smem constant byte address 0x4 - core index']
  #allocation1 [shape = 'u32[72,128]{1,0:T(1,128)}', space=vmem, size = 0x9000, scoped, tag = 'internal scratch']
  #allocation2 [shape = 'f32[1,128]{1,0:T(1,128)}', space=vmem, size = 0x200, scoped, tag = 'scratch operand']
  #allocation3 [shape = 'f32[1,128]{1,0:T(1,128)}', space=vmem, size = 0x200, scoped, tag = 'scratch operand']
  %s0 = inlined_call_operand.hbm [shape: f32[8,128], index: 0, kind: input, shape index: {}]
  %s1 = inlined_call_operand.hbm [shape: f32[1,128], index: 1, kind: output, shape index: {0}]
  %s2 = inlined_call_operand.hbm [shape: f32[1,128], index: 2, kind: output, shape index: {1}]
  %3 = xla_tuple %s1, %s2
  %s4 = sld [smem:[#allocation0]]
  $region34: #{tpu_custom_call.1} parent=0
    _
  %s6 = ssub.s32 1, %s4
  %s7 = scalar_select 0, %s6, %s4
  $region1: #{tpu_custom_call.1} parent=0
    #allocation4 [shape = 'u8[4096]{0}', space=vmem, size = 0x1000, scoped, tag = 'input window, operand 0, single buffered']
    #allocation5 [shape = 's32[1]{0}', space=sflag, size = 0x4, scoped, tag = 'scoped memory for tpu_custom_call.1']
    #allocation6 [shape = 's32[1]{0}', space=sflag, size = 0x4, scoped, tag = 'scoped memory for tpu_custom_call.1']
    #allocation7 [shape = 'u8[512]{0}', space=vmem, size = 0x400, scoped, tag = 'output window, operand 0, single buffered']
    #allocation8 [shape = 'u8[512]{0}', space=vmem, size = 0x400, scoped, tag = 'output window, operand 1, single buffered']
    #allocation9 [shape = 's32[1]{0}', space=sflag, size = 0x4, scoped, tag = 'scoped memory for tpu_custom_call.1']
    %8 = vsyncpa [#allocation5], 0
    %9 = vsyncpa [#allocation6], 0
    %10 = vsyncpa [#allocation9], 0
    // Predicated region
    $region2: #{tpu_custom_call.1} parent=1 // pred_check
      _
    $region3: #{tpu_custom_call.1} parent=1 // pred_check_branch
      %12 = sbr.rel (0) target = $region5
    $region4: #{tpu_custom_call.1} parent=1 // pred_region
      %14 = vsyncadd [#allocation5], 0
      %s16 = sshll.u32 %s0, 4
      %s17 = int_to_ptr.hbm [resolvable:$true] %s16
      %s18 = sshll.u32 [#allocation4], 4
      %s19 = int_to_ptr.vmem [resolvable:$true] %s18
      %21 = dma.hbm_to_vmem [thread:$0]  %s17, 128, %s19, [#allocation5]
    $region5: #{tpu_custom_call.1} parent=1 // pred_fallthru
      _
    // Predicated region
    $region6: #{tpu_custom_call.1} parent=1 // pred_check
      _
    $region7: #{tpu_custom_call.1} parent=1 // pred_check_branch
      %23 = sbr.rel (0) target = $region9
    $region8: #{tpu_custom_call.1} parent=1 // pred_region
      %25 = dma.done [#allocation5], 128
    $region9: #{tpu_custom_call.1} parent=1 // pred_fallthru
      _
    %p26 = scmp.eq.s32.totalorder 0, 0
    // Predicated region
    $region10: #{tpu_custom_call.1} parent=1 // pred_check
      %p27 = pneg %p26
    $region11: #{tpu_custom_call.1} parent=1 // pred_check_branch
      %29 = sbr.rel (%p27) target = $region13
    $region12: #{tpu_custom_call.1} parent=1 // pred_region
      %30 = vst [vmem:[#allocation2] sm:$0x1] 0.0
      %31 = vst [vmem:[#allocation3] sm:$0x1] 0.0
    $region13: #{tpu_custom_call.1} parent=1 // pred_fallthru
      _
    %v32 = vld [vmem:[#allocation4] sm:$0xff]
    %v33 = vld [vmem:[#allocation2] sm:$0x1]
    %v34 = vrot.slane %v32, 4
    %v35 = vadd.f32 %v32, %v34
    %v36 = vrot.slane %v35, 2
    %v37 = vadd.f32 %v35, %v36
    %v38 = vrot.slane %v37, 1
    %v39 = vadd.f32 %v37, %v38
    %v40 = vadd.f32 %v33, %v39
    %41 = vst [vmem:[#allocation2] sm:$0x1] %v40
    %v42 = vld [vmem:[#allocation3] sm:$0x1]
    %v43 = vmul.f32 %v32, %v32
    %v44 = vrot.slane %v43, 4
    %v45 = vadd.f32 %v43, %v44
    %v46 = vrot.slane %v45, 2
    %v47 = vadd.f32 %v45, %v46
    %v48 = vrot.slane %v47, 1
    %v49 = vadd.f32 %v47, %v48
    %v50 = vadd.f32 %v42, %v49
    %51 = vst [vmem:[#allocation3] sm:$0x1] %v50
    // Predicated region
    $region14: #{tpu_custom_call.1} parent=1 // pred_check
      %p52 = pneg %p26
    $region15: #{tpu_custom_call.1} parent=1 // pred_check_branch
      %54 = sbr.rel (%p52) target = $region17
    $region16: #{tpu_custom_call.1} parent=1 // pred_region
      %v55 = vld [vmem:[#allocation2] sm:$0x1]
      %v56 = vmul.f32 %v55, 0.125
      %v57 = vld [vmem:[#allocation3] sm:$0x1]
      %v58 = vmul.f32 %v57, 0.125
      %v59 = vmul.f32 %v56, %v56
      %v60 = vsub.f32 %v58, %v59
      %61 = vst [vmem:[#allocation7] sm:$0x1] %v56
      %v62 = vadd.f32 %v60, 1e-05
      %v63 = vrsqrt.pop %v62
      %v64 = vmul.f32 %v63, %v62
      %v65 = vmul.f32 %v64, %v63
      %v66 = vmul.f32 0.5, %v65
      %v67 = vsub.f32 1.5, %v66
      %v68 = vmul.f32 %v63, %v67
      %vm69 = vweird.f32 %v62
      %vm70 = vweird.f32 %v63
      %vm71 = vmor %vm69, %vm70
      %v72 = vsel %vm71, %v63, %v68
      %73 = vst [vmem:[#allocation8] sm:$0x1] %v72
    $region17: #{tpu_custom_call.1} parent=1 // pred_fallthru
      _
    // Predicated region
    $region18: #{tpu_custom_call.1} parent=1 // pred_check
      _
    $region19: #{tpu_custom_call.1} parent=1 // pred_check_branch
      %75 = sbr.rel (0) target = $region21
    $region20: #{tpu_custom_call.1} parent=1 // pred_region
      %77 = vsyncadd [#allocation6], 0
      %s79 = sshll.u32 [#allocation7], 4
      %s80 = int_to_ptr.vmem [resolvable:$true] %s79
      %s81 = sshll.u32 %s1, 4
      %s82 = int_to_ptr.hbm [resolvable:$true] %s81
      %84 = dma.vmem_to_hbm [thread:$0]  %s80, 16, %s82, [#allocation6]
    $region21: #{tpu_custom_call.1} parent=1 // pred_fallthru
      _
    // Predicated region
    $region22: #{tpu_custom_call.1} parent=1 // pred_check
      _
    $region23: #{tpu_custom_call.1} parent=1 // pred_check_branch
      %86 = sbr.rel (0) target = $region25
    $region24: #{tpu_custom_call.1} parent=1 // pred_region
      %88 = vsyncadd [#allocation9], 0
      %s90 = sshll.u32 [#allocation8], 4
      %s91 = int_to_ptr.vmem [resolvable:$true] %s90
      %s92 = sshll.u32 %s2, 4
      %s93 = int_to_ptr.hbm [resolvable:$true] %s92
      %95 = dma.vmem_to_hbm [thread:$0]  %s91, 16, %s93, [#allocation9]
    $region25: #{tpu_custom_call.1} parent=1 // pred_fallthru
      _
    // Predicated region
    $region26: #{tpu_custom_call.1} parent=1 // pred_check
      _
    $region27: #{tpu_custom_call.1} parent=1 // pred_check_branch
      %97 = sbr.rel (0) target = $region29
    $region28: #{tpu_custom_call.1} parent=1 // pred_region
      %99 = dma.done [#allocation6], 16
    $region29: #{tpu_custom_call.1} parent=1 // pred_fallthru
      _
    // Predicated region
    $region30: #{tpu_custom_call.1} parent=1 // pred_check
      _
    $region31: #{tpu_custom_call.1} parent=1 // pred_check_branch
      %101 = sbr.rel (0) target = $region33
    $region32: #{tpu_custom_call.1} parent=1 // pred_region
      %103 = dma.done [#allocation9], 16
    $region33: #{tpu_custom_call.1} parent=1 // pred_fallthru
      _
    %104 = vsyncpa [#allocation5], 1
    %105 = vsyncpa [#allocation6], 1
    %106 = vsyncpa [#allocation9], 1

</llo_original>
